<compile_context>
chip_gen: v7x
topology: tpu7x:2x2x1
jax: 0.10.0
libtpu: 0.0.40
codegen_flags: <defaults>
</compile_context>

<pallas_src>
import functools

import jax
import jax.numpy as jnp
from jax import lax
from jax.experimental import pallas as pl
from jax.experimental.pallas import tpu as pltpu

LANES = 128     # lane width of the packed hidden state / weight slabs
OUT_COLS = 8    # packed output columns (0=logprob, 1=value, 2=entropy, rest 0)


def _round_up(x, m):
    return ((x + m - 1) // m) * m


def actor_critic_kernel(state_ref, action_ref, w1_ref, wr_ref, b_ref, out_ref,
                        *, n_latent, action_dim):
    """One batch tile: fused actor+critic MLPs, softmax stats, packed output."""
    del action_dim  # lane mask is baked into b_ref row 3 at pack time
    cdt = w1_ref.dtype                     # matmul input dtype (f32 or bf16)
    x = state_ref[...].astype(cdt)         # (Bt, S)

    # ---- fused layer 1: lanes [0,N)=actor hidden, [N,2N)=critic hidden ----
    h = jnp.dot(x, w1_ref[...], preferred_element_type=jnp.float32) + b_ref[0:1, :]
    h = jnp.maximum(h, 0.0)                                        # (Bt, 128) f32

    # ---- fused layer 2: block-diagonal (aw2, vw2) ----
    h = jnp.dot(h.astype(cdt), wr_ref[0],
                preferred_element_type=jnp.float32) + b_ref[1:2, :]
    h = jnp.maximum(h, 0.0)

    # ---- fused layer 3: actor L3 (lanes [0,N)) + critic value (lane N) ----
    z3 = jnp.dot(h.astype(cdt), wr_ref[1],
                 preferred_element_type=jnp.float32) + b_ref[2:3, :]
    value = z3[:, n_latent:n_latent + 1]          # (Bt, 1) critic value, no ReLU
    h3 = jnp.maximum(z3, 0.0)                     # ReLU; extra lanes hit zero W4 rows

    # ---- actor layer 4: logits; pad lanes already at -1e30 via the bias ----
    logits = jnp.dot(h3.astype(cdt), wr_ref[2],
                     preferred_element_type=jnp.float32) + b_ref[3:4, :]

    # ---- numerically-stable softmax stats over the 128 lanes (f32) ----
    m = jnp.max(logits, axis=-1, keepdims=True)
    z = logits - m
    e = jnp.exp(z)                                # masked lanes underflow to 0
    s = jnp.sum(e, axis=-1, keepdims=True)
    log_s = jnp.log(s)
    logp = z - log_s                              # log-probs

    # Categorical.log_prob(action): one-hot gather (no dynamic gather on TPU).
    col = lax.broadcasted_iota(jnp.int32, logits.shape, 1)       # (Bt, 128)
    onehot = (col == action_ref[...]).astype(jnp.float32)
    logprob = jnp.sum(onehot * logp, axis=-1, keepdims=True)     # (Bt, 1)

    # Categorical.entropy() folded: -sum p*logp = log(s) - sum(e*z)/s  (exact divide).
    entropy = log_s - jnp.sum(e * z, axis=-1, keepdims=True) / s

    # ---- pack narrow output: col0=logprob, col1=value, col2=entropy ----
    col8 = lax.broadcasted_iota(jnp.int32, out_ref.shape, 1)     # (Bt, 8)
    out_ref[...] = (jnp.where(col8 == 0, logprob, 0.0)
                    + jnp.where(col8 == 1, value, 0.0)
                    + jnp.where(col8 == 2, entropy, 0.0))


def pack_params(p, state_dim, action_dim, n_latent, dtype=jnp.float32):
    """Host-side packing of per-layer weights into fused lane-dense slabs.

    `dtype` is the MXU input dtype for the weight slabs (bf16 recommended on
    v5e/v6e/v7x; f32 keeps exact parity with the torch module).  Biases stay f32.
    """
    N = n_latent
    assert 2 * N <= LANES and action_dim <= LANES and state_dim <= LANES, \
        "n_latent/action_dim/state_dim too large for a single 128-lane slab"
    # TODO(synk): if n_latent ever exceeds 64, widen LANES to 256 on v6e/v7x
    # (one 256-wide slab fills the 256x256 MXU) instead of splitting heads.

    w1 = jnp.zeros((state_dim, LANES), jnp.float32)
    w1 = w1.at[:, 0:N].set(p["aw1"]).at[:, N:2 * N].set(p["vw1"])

    W2 = jnp.zeros((LANES, LANES), jnp.float32)
    W2 = W2.at[0:N, 0:N].set(p["aw2"]).at[N:2 * N, N:2 * N].set(p["vw2"])

    W3 = jnp.zeros((LANES, LANES), jnp.float32)
    W3 = W3.at[0:N, 0:N].set(p["aw3"]).at[N:2 * N, N:N + 1].set(p["vw3"])

    W4 = jnp.zeros((LANES, LANES), jnp.float32)
    W4 = W4.at[0:N, 0:action_dim].set(p["aw4"])

    w_rest = jnp.stack([W2, W3, W4], axis=0)                      # (3,128,128)

    b = jnp.zeros((4, LANES), jnp.float32)
    b = b.at[0, 0:N].set(p["ab1"][0]).at[0, N:2 * N].set(p["vb1"][0])
    b = b.at[1, 0:N].set(p["ab2"][0]).at[1, N:2 * N].set(p["vb2"][0])
    b = b.at[2, 0:N].set(p["ab3"][0]).at[2, N:N + 1].set(p["vb3"][0])
    b = b.at[3, 0:action_dim].set(p["ab4"][0])
    b = b.at[3, action_dim:].set(-1e30)   # bake the softmax lane mask into the bias
    return w1.astype(dtype), w_rest.astype(dtype), b              # b stays f32


def actor_critic_evaluate(state, action, packed, *, n_latent, action_dim,
                          batch_tile=2048, vmem_limit_bytes=None):
    """state: (B, S) f32, action: (B,) int, packed: output of pack_params."""
    w1, w_rest, b = packed
    B, S = state.shape

    # Batch tile: multiple of 8 sublanes.  Default 2048 keeps double-buffered
    # blocks well under even v5e's 16 MiB scoped-VMEM default; callers pushing
    # batch_tile past ~4K should pass vmem_limit_bytes.
    bt = min(batch_tile, _round_up(B, 8))
    if B >= 16:
        # v7x: keep >= 2 grid steps so both TensorCores share the batch.
        bt = min(bt, _round_up(pl.cdiv(B, 2), 8))
    grid = (pl.cdiv(B, bt),)   # uneven last tile handled by Pallas (no jnp.pad copy)

    action2d = action.reshape(B, 1).astype(jnp.int32)

    kernel = functools.partial(actor_critic_kernel,
                               n_latent=n_latent, action_dim=action_dim)

    packed_out = pl.pallas_call(
        kernel,
        out_shape=jax.ShapeDtypeStruct((B, OUT_COLS), jnp.float32),
        grid_spec=pltpu.PrefetchScalarGridSpec(
            num_scalar_prefetch=0,
            grid=grid,
            in_specs=[
                pl.BlockSpec((bt, S), lambda i: (i, 0)),          # state (tiled)
                pl.BlockSpec((bt, 1), lambda i: (i, 0)),          # action (tiled)
                pl.BlockSpec(w1.shape, lambda i: (0, 0)),         # resident
                pl.BlockSpec(w_rest.shape, lambda i: (0, 0, 0)),  # resident
                pl.BlockSpec(b.shape, lambda i: (0, 0)),          # resident
            ],
            out_specs=pl.BlockSpec((bt, OUT_COLS), lambda i: (i, 0)),
        ),
        compiler_params=pltpu.CompilerParams(
            dimension_semantics=("parallel",),
            vmem_limit_bytes=vmem_limit_bytes),
    )(state, action2d, w1, w_rest, b)

    # match torch: log_prob -> (B,), squeeze(state_value) -> (B,), entropy -> (B,)
    return packed_out[:, 0], packed_out[:, 1], packed_out[:, 2]


def init_params(key, state_dim, action_dim, n_latent_var):
    """Deterministic init mimicking nn.Linear default (U(-1/sqrt(fan_in), +))."""
    def linear(key, fan_in, fan_out):
        kw, kb = jax.random.split(key)
        bound = 1.0 / jnp.sqrt(fan_in)
        # stored pre-transposed as (in, out); bias as (1, out)
        w = jax.random.uniform(kw, (fan_in, fan_out), jnp.float32, -bound, bound)
        bb = jax.random.uniform(kb, (1, fan_out), jnp.float32, -bound, bound)
        return w, bb

    keys = jax.random.split(key, 7)
    p = {}
    p["aw1"], p["ab1"] = linear(keys[0], state_dim, n_latent_var)
    p["aw2"], p["ab2"] = linear(keys[1], n_latent_var, n_latent_var)
    p["aw3"], p["ab3"] = linear(keys[2], n_latent_var, n_latent_var)
    p["aw4"], p["ab4"] = linear(keys[3], n_latent_var, action_dim)
    p["vw1"], p["vb1"] = linear(keys[4], state_dim, n_latent_var)
    p["vw2"], p["vb2"] = linear(keys[5], n_latent_var, n_latent_var)
    p["vw3"], p["vb3"] = linear(keys[6], n_latent_var, 1)
    return p


def _reference(state, action, p, matmul_dtype=jnp.float32):
    """Pure-JAX reference of ActorCritic.evaluate (matmul inputs cast like the kernel)."""
    def mm(x, w):
        return jnp.dot(x.astype(matmul_dtype), w.astype(matmul_dtype),
                       preferred_element_type=jnp.float32)
    relu = lambda v: jnp.maximum(v, 0.0)
    h = relu(mm(state, p["aw1"]) + p["ab1"])
    h = relu(mm(h, p["aw2"]) + p["ab2"])
    h = relu(mm(h, p["aw3"]) + p["ab3"])
    logits = mm(h, p["aw4"]) + p["ab4"]
    logp = jax.nn.log_softmax(logits, axis=-1)
    probs = jnp.exp(logp)
    lp = jnp.take_along_axis(logp, action[:, None], axis=-1)[:, 0]
    ent = -jnp.sum(probs * logp, axis=-1)
    g = relu(mm(state, p["vw1"]) + p["vb1"])
    g = relu(mm(g, p["vw2"]) + p["vb2"])
    val = (mm(g, p["vw3"]) + p["vb3"])[:, 0]
    return lp, val, ent


def _check(B, state_dim, action_dim, n_latent, seed, batch_tile, matmul_dtype, tol):
    key = jax.random.PRNGKey(seed)
    k_params, k_state, k_action = jax.random.split(key, 3)
    params = init_params(k_params, state_dim, action_dim, n_latent)
    packed = pack_params(params, state_dim, action_dim, n_latent, dtype=matmul_dtype)
    state = jax.random.normal(k_state, (B, state_dim), jnp.float32)
    action = jax.random.randint(k_action, (B,), 0, action_dim, jnp.int32)

    lp, val, ent = actor_critic_evaluate(state, action, packed,
                                         n_latent=n_latent,
                                         action_dim=action_dim,
                                         batch_tile=batch_tile)
    jax.block_until_ready((lp, val, ent))

    ref_lp, ref_val, ref_ent = _reference(state, action, params,
                                          matmul_dtype=matmul_dtype)
    assert jnp.allclose(lp, ref_lp, atol=tol, rtol=tol), "logprob mismatch"
    assert jnp.allclose(val, ref_val, atol=tol, rtol=tol), "value mismatch"
    assert jnp.allclose(ent, ref_ent, atol=tol, rtol=tol), "entropy mismatch"


if __name__ == "__main__":
    # f32 parity path: small shapes, single tile, exact torch-equivalent math.
    _check(B=8, state_dim=16, action_dim=4, n_latent=32, seed=0,
           batch_tile=2048, matmul_dtype=jnp.float32, tol=2e-4)
    # bf16-MXU fast path + multi-tile + ragged batch (uneven grid, no pad copy).
    # bf16 matmul inputs deviate slightly from exact f32 torch parity (review
    # item); compared against a bf16-emulating reference with a loose tol to
    # absorb accumulation-order / rounding-boundary differences.
    _check(B=300, state_dim=16, action_dim=4, n_latent=32, seed=1,
           batch_tile=128, matmul_dtype=jnp.bfloat16, tol=5e-3)

    # TODO(synk): act()'s Categorical.sample() is stochastic/host-side and
    # forward() raises NotImplementedError; only evaluate()'s deterministic
    # math is implemented in the kernel.
    print("KERNEL_OK")
</pallas_src>

<mosaic_0001>
module attributes {stable_mosaic.version = 11 : i64} {
  func.func @actor_critic_kernel(%arg0: i32, %arg1: memref<8x16xf32, #tpu.memory_space<vmem>>, %arg2: memref<8x1xi32, #tpu.memory_space<vmem>>, %arg3: memref<16x128xf32, #tpu.memory_space<vmem>>, %arg4: memref<3x128x128xf32, #tpu.memory_space<vmem>>, %arg5: memref<4x128xf32, #tpu.memory_space<vmem>>, %arg6: memref<8x8xf32, #tpu.memory_space<vmem>>) attributes {dimension_semantics = [#tpu.dimension_semantics<parallel>], iteration_bounds = array<i64: 1>, scalar_prefetch = 0 : i64, scratch_operands = 0 : i64, tpu.core_type = #tpu.core_type<tc>, window_params = [{transform_indices = @transform_0, window_bounds = array<i64: 8, 16>}, {transform_indices = @transform_1, window_bounds = array<i64: 8, 1>}, {pipeline_mode = #tpu.pipeline_mode<synchronous>, transform_indices = @transform_2, window_bounds = array<i64: 16, 128>}, {pipeline_mode = #tpu.pipeline_mode<synchronous>, transform_indices = @transform_3, window_bounds = array<i64: 3, 128, 128>}, {pipeline_mode = #tpu.pipeline_mode<synchronous>, transform_indices = @transform_4, window_bounds = array<i64: 4, 128>}, {transform_indices = @transform_5, window_bounds = array<i64: 8, 8>}]} {
    %c0 = arith.constant 0 : index
    %c0_0 = arith.constant 0 : index
    %0 = vector.load %arg1[%c0, %c0_0] : memref<8x16xf32, #tpu.memory_space<vmem>>, vector<8x16xf32>
    %c0_1 = arith.constant 0 : index
    %c0_2 = arith.constant 0 : index
    %1 = vector.load %arg3[%c0_1, %c0_2] : memref<16x128xf32, #tpu.memory_space<vmem>>, vector<16x128xf32>
    %cst = arith.constant dense<0.000000e+00> : vector<8x128xf32>
    %2 = tpu.matmul %0, %1, %cst {dimension_numbers = #tpu.dot_dimension_numbers<[1], [0], [0], [1], [0, 0, 1, 1], [], []>} : vector<8x16xf32>, vector<16x128xf32>, vector<8x128xf32> -> vector<8x128xf32>
    %c0_3 = arith.constant 0 : index
    %c0_4 = arith.constant 0 : index
    %3 = vector.load %arg5[%c0_3, %c0_4] : memref<4x128xf32, #tpu.memory_space<vmem>>, vector<1x128xf32>
    %4 = vector.broadcast %3 : vector<1x128xf32> to vector<8x128xf32>
    %5 = arith.addf %2, %4 : vector<8x128xf32>
    %cst_5 = arith.constant 0.000000e+00 : f32
    %6 = vector.broadcast %cst_5 : f32 to vector<8x128xf32>
    %7 = arith.maximumf %5, %6 : vector<8x128xf32>
    %c0_6 = arith.constant 0 : index
    %c0_7 = arith.constant 0 : index
    %c0_8 = arith.constant 0 : index
    %8 = vector.load %arg4[%c0_6, %c0_7, %c0_8] : memref<3x128x128xf32, #tpu.memory_space<vmem>>, vector<1x128x128xf32>
    %9 = vector.shape_cast %8 : vector<1x128x128xf32> to vector<128x128xf32>
    %cst_9 = arith.constant dense<0.000000e+00> : vector<8x128xf32>
    %10 = tpu.matmul %7, %9, %cst_9 {dimension_numbers = #tpu.dot_dimension_numbers<[1], [0], [0], [1], [0, 0, 1, 1], [], []>} : vector<8x128xf32>, vector<128x128xf32>, vector<8x128xf32> -> vector<8x128xf32>
    %c1 = arith.constant 1 : index
    %c0_10 = arith.constant 0 : index
    %11 = vector.load %arg5[%c1, %c0_10] : memref<4x128xf32, #tpu.memory_space<vmem>>, vector<1x128xf32>
    %12 = vector.broadcast %11 : vector<1x128xf32> to vector<8x128xf32>
    %13 = arith.addf %10, %12 : vector<8x128xf32>
    %cst_11 = arith.constant 0.000000e+00 : f32
    %14 = vector.broadcast %cst_11 : f32 to vector<8x128xf32>
    %15 = arith.maximumf %13, %14 : vector<8x128xf32>
    %c1_12 = arith.constant 1 : index
    %c0_13 = arith.constant 0 : index
    %c0_14 = arith.constant 0 : index
    %16 = vector.load %arg4[%c1_12, %c0_13, %c0_14] : memref<3x128x128xf32, #tpu.memory_space<vmem>>, vector<1x128x128xf32>
    %17 = vector.shape_cast %16 : vector<1x128x128xf32> to vector<128x128xf32>
    %cst_15 = arith.constant dense<0.000000e+00> : vector<8x128xf32>
    %18 = tpu.matmul %15, %17, %cst_15 {dimension_numbers = #tpu.dot_dimension_numbers<[1], [0], [0], [1], [0, 0, 1, 1], [], []>} : vector<8x128xf32>, vector<128x128xf32>, vector<8x128xf32> -> vector<8x128xf32>
    %c2 = arith.constant 2 : index
    %c0_16 = arith.constant 0 : index
    %19 = vector.load %arg5[%c2, %c0_16] : memref<4x128xf32, #tpu.memory_space<vmem>>, vector<1x128xf32>
    %20 = vector.broadcast %19 : vector<1x128xf32> to vector<8x128xf32>
    %21 = arith.addf %18, %20 : vector<8x128xf32>
    %22 = vector.extract_strided_slice %21 {offsets = [0, 32], sizes = [8, 1], strides = [1, 1]} : vector<8x128xf32> to vector<8x1xf32>
    %cst_17 = arith.constant 0.000000e+00 : f32
    %23 = vector.broadcast %cst_17 : f32 to vector<8x128xf32>
    %24 = arith.maximumf %21, %23 : vector<8x128xf32>
    %c2_18 = arith.constant 2 : index
    %c0_19 = arith.constant 0 : index
    %c0_20 = arith.constant 0 : index
    %25 = vector.load %arg4[%c2_18, %c0_19, %c0_20] : memref<3x128x128xf32, #tpu.memory_space<vmem>>, vector<1x128x128xf32>
    %26 = vector.shape_cast %25 : vector<1x128x128xf32> to vector<128x128xf32>
    %cst_21 = arith.constant dense<0.000000e+00> : vector<8x128xf32>
    %27 = tpu.matmul %24, %26, %cst_21 {dimension_numbers = #tpu.dot_dimension_numbers<[1], [0], [0], [1], [0, 0, 1, 1], [], []>} : vector<8x128xf32>, vector<128x128xf32>, vector<8x128xf32> -> vector<8x128xf32>
    %c3 = arith.constant 3 : index
    %c0_22 = arith.constant 0 : index
    %28 = vector.load %arg5[%c3, %c0_22] : memref<4x128xf32, #tpu.memory_space<vmem>>, vector<1x128xf32>
    %29 = vector.broadcast %28 : vector<1x128xf32> to vector<8x128xf32>
    %30 = arith.addf %27, %29 : vector<8x128xf32>
    %cst_23 = arith.constant dense<0xFF800000> : vector<8xf32>
    %31 = vector.multi_reduction <maximumf>, %30, %cst_23 [1] : vector<8x128xf32> to vector<8xf32>
    %32 = vector.shape_cast %31 : vector<8xf32> to vector<8x1xf32>
    %33 = vector.broadcast %32 : vector<8x1xf32> to vector<8x128xf32>
    %34 = arith.subf %30, %33 : vector<8x128xf32>
    %35 = math.exp %34 : vector<8x128xf32>
    %cst_24 = arith.constant dense<0.000000e+00> : vector<8xf32>
    %36 = vector.multi_reduction <add>, %35, %cst_24 [1] : vector<8x128xf32> to vector<8xf32>
    %37 = vector.shape_cast %36 : vector<8xf32> to vector<8x1xf32>
    %38 = math.log %37 : vector<8x1xf32>
    %39 = vector.broadcast %38 : vector<8x1xf32> to vector<8x128xf32>
    %40 = arith.subf %34, %39 : vector<8x128xf32>
    %41 = tpu.iota {dimensions = array<i32: 1>} : vector<8x128xi32>
    %c0_25 = arith.constant 0 : index
    %c0_26 = arith.constant 0 : index
    %42 = vector.load %arg2[%c0_25, %c0_26] : memref<8x1xi32, #tpu.memory_space<vmem>>, vector<8x1xi32>
    %43 = vector.broadcast %42 : vector<8x1xi32> to vector<8x128xi32>
    %44 = arith.cmpi eq, %41, %43 : vector<8x128xi32>
    %45 = arith.extui %44 : vector<8x128xi1> to vector<8x128xi32>
    %46 = arith.sitofp %45 : vector<8x128xi32> to vector<8x128xf32>
    %47 = arith.mulf %46, %40 : vector<8x128xf32>
    %cst_27 = arith.constant dense<0.000000e+00> : vector<8xf32>
    %48 = vector.multi_reduction <add>, %47, %cst_27 [1] : vector<8x128xf32> to vector<8xf32>
    %49 = vector.shape_cast %48 : vector<8xf32> to vector<8x1xf32>
    %50 = arith.mulf %35, %34 : vector<8x128xf32>
    %cst_28 = arith.constant dense<0.000000e+00> : vector<8xf32>
    %51 = vector.multi_reduction <add>, %50, %cst_28 [1] : vector<8x128xf32> to vector<8xf32>
    %52 = vector.shape_cast %51 : vector<8xf32> to vector<8x1xf32>
    %53 = arith.divf %52, %37 : vector<8x1xf32>
    %54 = arith.subf %38, %53 : vector<8x1xf32>
    %55 = tpu.iota {dimensions = array<i32: 1>} : vector<8x8xi32>
    %c0_i32 = arith.constant 0 : i32
    %56 = vector.broadcast %c0_i32 : i32 to vector<8x8xi32>
    %57 = arith.cmpi eq, %55, %56 : vector<8x8xi32>
    %cst_29 = arith.constant 0.000000e+00 : f32
    %58 = vector.shape_cast %49 : vector<8x1xf32> to vector<8x1xf32>
    %59 = vector.broadcast %58 : vector<8x1xf32> to vector<8x8xf32>
    %60 = vector.broadcast %cst_29 : f32 to vector<8x8xf32>
    %61 = arith.select %57, %59, %60 : vector<8x8xi1>, vector<8x8xf32>
    %c1_i32 = arith.constant 1 : i32
    %62 = vector.broadcast %c1_i32 : i32 to vector<8x8xi32>
    %63 = arith.cmpi eq, %55, %62 : vector<8x8xi32>
    %cst_30 = arith.constant 0.000000e+00 : f32
    %64 = vector.shape_cast %22 : vector<8x1xf32> to vector<8x1xf32>
    %65 = vector.broadcast %64 : vector<8x1xf32> to vector<8x8xf32>
    %66 = vector.broadcast %cst_30 : f32 to vector<8x8xf32>
    %67 = arith.select %63, %65, %66 : vector<8x8xi1>, vector<8x8xf32>
    %68 = arith.addf %61, %67 : vector<8x8xf32>
    %c2_i32 = arith.constant 2 : i32
    %69 = vector.broadcast %c2_i32 : i32 to vector<8x8xi32>
    %70 = arith.cmpi eq, %55, %69 : vector<8x8xi32>
    %cst_31 = arith.constant 0.000000e+00 : f32
    %71 = vector.shape_cast %54 : vector<8x1xf32> to vector<8x1xf32>
    %72 = vector.broadcast %71 : vector<8x1xf32> to vector<8x8xf32>
    %73 = vector.broadcast %cst_31 : f32 to vector<8x8xf32>
    %74 = arith.select %70, %72, %73 : vector<8x8xi1>, vector<8x8xf32>
    %75 = arith.addf %68, %74 : vector<8x8xf32>
    %c0_32 = arith.constant 0 : index
    %c0_33 = arith.constant 0 : index
    %76 = vector.load %arg6[%c0_32, %c0_33] : memref<8x8xf32, #tpu.memory_space<vmem>>, vector<8x8xf32>
    tpu.vector_store %arg6[%c0_32, %c0_33], %75 {strides = array<i32>} : memref<8x8xf32, #tpu.memory_space<vmem>>, vector<8x8xf32>,
    return
  }
  func.func @transform_0(%arg0: i32) -> (i32, i32) {
    %c0_i32 = arith.constant 0 : i32
    %c0_i32_0 = arith.constant 0 : i32
    return %arg0, %c0_i32 : i32, i32
  }
  func.func @transform_1(%arg0: i32) -> (i32, i32) {
    %c0_i32 = arith.constant 0 : i32
    %c0_i32_0 = arith.constant 0 : i32
    return %arg0, %c0_i32 : i32, i32
  }
  func.func @transform_2(%arg0: i32) -> (i32, i32) {
    %c0_i32 = arith.constant 0 : i32
    %c0_i32_0 = arith.constant 0 : i32
    %c0_i32_1 = arith.constant 0 : i32
    return %c0_i32, %c0_i32_0 : i32, i32
  }
  func.func @transform_3(%arg0: i32) -> (i32, i32, i32) {
    %c0_i32 = arith.constant 0 : i32
    %c0_i32_0 = arith.constant 0 : i32
    %c0_i32_1 = arith.constant 0 : i32
    %c0_i32_2 = arith.constant 0 : i32
    return %c0_i32, %c0_i32_0, %c0_i32_1 : i32, i32, i32
  }
  func.func @transform_4(%arg0: i32) -> (i32, i32) {
    %c0_i32 = arith.constant 0 : i32
    %c0_i32_0 = arith.constant 0 : i32
    %c0_i32_1 = arith.constant 0 : i32
    return %c0_i32, %c0_i32_0 : i32, i32
  }
  func.func @transform_5(%arg0: i32) -> (i32, i32) {
    %c0_i32 = arith.constant 0 : i32
    %c0_i32_0 = arith.constant 0 : i32
    return %arg0, %c0_i32 : i32, i32
  }
}

</mosaic_0001>

<llo_original>
// kernel: tpu_custom_call.1
$region0: #{tpu_custom_call.1}
  #allocation0 [shape = 'u32[]', space=smem, size = 0x4, offset = 0x4, fixed_abs, tag = 'smem constant byte address 0x4 - core index']
  #allocation1 [shape = 'u32[144,128]{1,0:T(1,128)}', space=vmem, size = 0x12000, scoped, tag = 'internal scratch']
  %s0 = inlined_call_operand.hbm [shape: f32[8,16], index: 0, kind: input, shape index: {}]
  %s1 = inlined_call_operand.vmem [shape: s32[8,1], index: 1, kind: input, shape index: {}]
  %s2 = inlined_call_operand.vmem [shape: f32[16,128], index: 2, kind: input, shape index: {}]
  %s3 = inlined_call_operand.hbm [shape: f32[3,128,128], index: 3, kind: input, shape index: {}]
  %s4 = inlined_call_operand.vmem [shape: f32[4,128], index: 4, kind: input, shape index: {}]
  %s5 = inlined_call_operand.hbm [shape: f32[8,8], index: 5, kind: output, shape index: {}]
  %s6 = sld [smem:[#allocation0]]
  $region38: #{tpu_custom_call.1} parent=0
    _
  %s8 = ssub.s32 1, %s6
  %s9 = scalar_select 0, %s8, %s6
  $region1: #{tpu_custom_call.1} parent=0
    #allocation2 [shape = 'u8[4096]{0}', space=vmem, size = 0x1000, scoped, tag = 'input window, operand 0, single buffered']
    #allocation3 [shape = 's32[1]{0}', space=sflag, size = 0x4, scoped, tag = 'scoped memory for tpu_custom_call.1']
    #allocation4 [shape = 's32[1]{0}', space=sflag, size = 0x4, scoped, tag = 'scoped memory for tpu_custom_call.1']
    #allocation5 [shape = 'u8[196608]{0}', space=vmem, size = 0x30000, scoped, tag = 'input window, operand 3, single buffered']
    #allocation6 [shape = 's32[1]{0}', space=sflag, size = 0x4, scoped, tag = 'scoped memory for tpu_custom_call.1']
    #allocation7 [shape = 'u8[4096]{0}', space=vmem, size = 0x1000, scoped, tag = 'output window, operand 0, single buffered']
    %10 = vsyncpa [#allocation3], 0
    %11 = vsyncpa [#allocation6], 0
    %12 = vsyncpa [#allocation4], 0
    // Predicated region
    $region2: #{tpu_custom_call.1} parent=1 // pred_check
      _
    $region3: #{tpu_custom_call.1} parent=1 // pred_check_branch
      %14 = sbr.rel (0) target = $region5
    $region4: #{tpu_custom_call.1} parent=1 // pred_region
      %s16 = ssub.s32 128, 128
      %17 = vsyncadd [#allocation3], %s16
      %s19 = sshll.u32 [#allocation2], 4
      %s20 = int_to_ptr.vmem [resolvable:$true] %s19
      %22 = dma.hbm_to_vmem [thread:$0]  %s0, 128, %s20, [#allocation3]
    $region5: #{tpu_custom_call.1} parent=1 // pred_fallthru
      _
    // Predicated region
    $region6: #{tpu_custom_call.1} parent=1 // pred_check
      _
    $region7: #{tpu_custom_call.1} parent=1 // pred_check_branch
      %24 = sbr.rel (0) target = $region9
    $region8: #{tpu_custom_call.1} parent=1 // pred_region
      _
    $region9: #{tpu_custom_call.1} parent=1 // pred_fallthru
      _
    // Predicated region
    $region10: #{tpu_custom_call.1} parent=1 // pred_check
      _
    $region11: #{tpu_custom_call.1} parent=1 // pred_check_branch
      %26 = sbr.rel (0) target = $region13
    $region12: #{tpu_custom_call.1} parent=1 // pred_region
      _
    $region13: #{tpu_custom_call.1} parent=1 // pred_fallthru
      _
    // Predicated region
    $region14: #{tpu_custom_call.1} parent=1 // pred_check
      _
    $region15: #{tpu_custom_call.1} parent=1 // pred_check_branch
      %28 = sbr.rel (0) target = $region17
    $region16: #{tpu_custom_call.1} parent=1 // pred_region
      %s30 = ssub.s32 6144, 6144
      %31 = vsyncadd [#allocation6], %s30
      %s32 = sshll.u32 [#allocation5], 4
      %s33 = int_to_ptr.vmem [resolvable:$true] %s32
      %38 = dma.hbm_to_vmem [thread:$0]  %s3, 6144, %s33, [#allocation6], 128, 128, 8
    $region17: #{tpu_custom_call.1} parent=1 // pred_fallthru
      _
    // Predicated region
    $region18: #{tpu_custom_call.1} parent=1 // pred_check
      _
    $region19: #{tpu_custom_call.1} parent=1 // pred_check_branch
      %40 = sbr.rel (0) target = $region21
    $region20: #{tpu_custom_call.1} parent=1 // pred_region
      _
    $region21: #{tpu_custom_call.1} parent=1 // pred_fallthru
      _
    // Predicated region
    $region22: #{tpu_custom_call.1} parent=1 // pred_check
      _
    $region23: #{tpu_custom_call.1} parent=1 // pred_check_branch
      %42 = sbr.rel (0) target = $region25
    $region24: #{tpu_custom_call.1} parent=1 // pred_region
      %43 = dma.done [#allocation3], 128
    $region25: #{tpu_custom_call.1} parent=1 // pred_fallthru
      _
    // Predicated region
    $region26: #{tpu_custom_call.1} parent=1 // pred_check
      _
    $region27: #{tpu_custom_call.1} parent=1 // pred_check_branch
      %45 = sbr.rel (0) target = $region29
    $region28: #{tpu_custom_call.1} parent=1 // pred_region
      %46 = dma.done [#allocation6], 6144
    $region29: #{tpu_custom_call.1} parent=1 // pred_fallthru
      _
    %v47 = vld [vmem:[#allocation2] sm:$0xff]
    %v48 = vld [vmem:[%s2] sm:$0xff]
    %v49 = vld [vmem:[%s2 + $0x8] sm:$0xff]
    %v50 = vld [vmem:[%s4] sm:$0x1]
    %v51 = vlaneseq
    %v52 = vshrl.u32 %v51, 7
    %v53 = vsub.s32 0, %v52
    %v54 = vrot.slane %v50, %v53
    %vm55 = vcmask 130048
    %v57 = vsel %vm55, %v47, 0
    %59 = vmatprep.subr.mxu0 0.0
    %60 = vmatpush1.msra.mxu0 %v48
    %61 = vmatprep.subr.mxu0 0.0
    %62 = vmatpush1.msra.mxu0 %v49
    %63 = vmatprep.subr.mxu0 0.0
    %64 = vmatpush1.msra.mxu0 0.0
    %65 = vmatprep.subr.mxu0 0.0
    %66 = vmatpush1.msra.mxu0 0.0
    %67 = vmatprep.subr.mxu0 0.0
    %68 = vmatpush1.msra.mxu0 0.0
    %69 = vmatprep.subr.mxu0 0.0
    %70 = vmatpush1.msra.mxu0 0.0
    %71 = vmatprep.subr.mxu0 0.0
    %72 = vmatpush1.msra.mxu0 0.0
    %73 = vmatprep.subr.mxu0 0.0
    %74 = vmatpush1.msra.mxu0 0.0
    %75 = vmatprep.subr.mxu0 0.0
    %76 = vmatpush1.msra.mxu0 0.0
    %77 = vmatprep.subr.mxu0 0.0
    %78 = vmatpush1.msra.mxu0 0.0
    %79 = vmatprep.subr.mxu0 0.0
    %80 = vmatpush1.msra.mxu0 0.0
    %81 = vmatprep.subr.mxu0 0.0
    %82 = vmatpush1.msra.mxu0 0.0
    %83 = vmatprep.subr.mxu0 0.0
    %84 = vmatpush1.msra.mxu0 0.0
    %85 = vmatprep.subr.mxu0 0.0
    %86 = vmatpush1.msra.mxu0 0.0
    %87 = vmatprep.subr.mxu0 0.0
    %88 = vmatpush1.msra.mxu0 0.0
    %89 = vmatprep.subr.mxu0 0.0
    %90 = vmatpush1.msra.mxu0 0.0
    %91 = vmatprep.subr.mxu0 0.0
    %92 = vmatpush1.msra.mxu0 0.0
    %93 = vmatprep.subr.mxu0 0.0
    %94 = vmatpush1.msra.mxu0 0.0
    %95 = vmatprep.subr.mxu0 0.0
    %96 = vmatpush1.msra.mxu0 0.0
    %97 = vmatprep.subr.mxu0 0.0
    %98 = vmatpush1.msra.mxu0 0.0
    %99 = vmatprep.subr.mxu0 0.0
    %100 = vmatpush1.msra.mxu0 0.0
    %101 = vmatprep.subr.mxu0 0.0
    %102 = vmatpush1.msra.mxu0 0.0
    %103 = vmatprep.subr.mxu0 0.0
    %104 = vmatpush1.msra.mxu0 0.0
    %105 = vmatprep.subr.mxu0 0.0
    %106 = vmatpush1.msra.mxu0 0.0
    %107 = vmatprep.subr.mxu0 0.0
    %108 = vmatpush1.msra.mxu0 0.0
    %109 = vmatprep.subr.mxu0 0.0
    %110 = vmatpush1.msra.mxu0 0.0
    %111 = vmatprep.subr.mxu0 0.0
    %112 = vmatpush1.msra.mxu0 0.0
    %113 = vmatprep.subr.mxu0 0.0
    %114 = vmatpush1.msra.mxu0 0.0
    %115 = vmatprep.subr.mxu0 0.0
    %116 = vmatpush1.msra.mxu0 0.0
    %117 = vmatprep.subr.mxu0 0.0
    %118 = vmatpush1.msra.mxu0 0.0
    %119 = vmatprep.subr.mxu0 0.0
    %120 = vmatpush1.msra.mxu0 0.0
    %121 = vmatprep.subr.mxu0 0.0
    %122 = vmatpush1.msra.mxu0 0.0
    %123 = vmatprep.mubr.f32.mxu0 0.0
    %124 = vmatmul.mubr.f32.gmra.mrb[0].mxu0 %v57
    %v125 = vpop.f32.mrb[0].mxu0
    %v126 = vadd.f32 %v54, %v125
    %v127 = vpop.f32.mrb[0].mxu0
    %128 = vdwg.mxu0
    %v129 = vmax.f32 %v126, 0.0
    %v130 = vld [vmem:[#allocation5] sm:$0xff]
    %v131 = vld [vmem:[#allocation5 + $0x8] sm:$0xff]
    %v132 = vld [vmem:[#allocation5 + $0x10] sm:$0xff]
    %v133 = vld [vmem:[#allocation5 + $0x18] sm:$0xff]
    %v134 = vld [vmem:[#allocation5 + $0x20] sm:$0xff]
    %v135 = vld [vmem:[#allocation5 + $0x28] sm:$0xff]
    %v136 = vld [vmem:[#allocation5 + $0x30] sm:$0xff]
    %v137 = vld [vmem:[#allocation5 + $0x38] sm:$0xff]
    %v138 = vld [vmem:[#allocation5 + $0x40] sm:$0xff]
    %v139 = vld [vmem:[#allocation5 + $0x48] sm:$0xff]
    %v140 = vld [vmem:[#allocation5 + $0x50] sm:$0xff]
    %v141 = vld [vmem:[#allocation5 + $0x58] sm:$0xff]
    %v142 = vld [vmem:[#allocation5 + $0x60] sm:$0xff]
    %v143 = vld [vmem:[#allocation5 + $0x68] sm:$0xff]
    %v144 = vld [vmem:[#allocation5 + $0x70] sm:$0xff]
    %v145 = vld [vmem:[#allocation5 + $0x78] sm:$0xff]
    %v146 = vld [vmem:[%s4 + $0x1] sm:$0x1]
    %v147 = vlaneseq
    %v148 = vshrl.u32 %v147, 7
    %v149 = vsub.s32 0, %v148
    %v150 = vrot.slane %v146, %v149
    %151 = vmatprep.subr.mxu0 0.0
    %152 = vmatpush1.msra.mxu0 %v130
    %153 = vmatprep.subr.mxu0 0.0
    %154 = vmatpush1.msra.mxu0 %v131
    %155 = vmatprep.subr.mxu0 0.0
    %156 = vmatpush1.msra.mxu0 %v132
    %157 = vmatprep.subr.mxu0 0.0
    %158 = vmatpush1.msra.mxu0 %v133
    %159 = vmatprep.subr.mxu0 0.0
    %160 = vmatpush1.msra.mxu0 %v134
    %161 = vmatprep.subr.mxu0 0.0
    %162 = vmatpush1.msra.mxu0 %v135
    %163 = vmatprep.subr.mxu0 0.0
    %164 = vmatpush1.msra.mxu0 %v136
    %165 = vmatprep.subr.mxu0 0.0
    %166 = vmatpush1.msra.mxu0 %v137
    %167 = vmatprep.subr.mxu0 0.0
    %168 = vmatpush1.msra.mxu0 %v138
    %169 = vmatprep.subr.mxu0 0.0
    %170 = vmatpush1.msra.mxu0 %v139
    %171 = vmatprep.subr.mxu0 0.0
    %172 = vmatpush1.msra.mxu0 %v140
    %173 = vmatprep.subr.mxu0 0.0
    %174 = vmatpush1.msra.mxu0 %v141
    %175 = vmatprep.subr.mxu0 0.0
    %176 = vmatpush1.msra.mxu0 %v142
    %177 = vmatprep.subr.mxu0 0.0
    %178 = vmatpush1.msra.mxu0 %v143
    %179 = vmatprep.subr.mxu0 0.0
    %180 = vmatpush1.msra.mxu0 %v144
    %181 = vmatprep.subr.mxu0 0.0
    %182 = vmatpush1.msra.mxu0 %v145
    %183 = vmatprep.subr.mxu0 0.0
    %184 = vmatpush1.msra.mxu0 0.0
    %185 = vmatprep.subr.mxu0 0.0
    %186 = vmatpush1.msra.mxu0 0.0
    %187 = vmatprep.subr.mxu0 0.0
    %188 = vmatpush1.msra.mxu0 0.0
    %189 = vmatprep.subr.mxu0 0.0
    %190 = vmatpush1.msra.mxu0 0.0
    %191 = vmatprep.subr.mxu0 0.0
    %192 = vmatpush1.msra.mxu0 0.0
    %193 = vmatprep.subr.mxu0 0.0
    %194 = vmatpush1.msra.mxu0 0.0
    %195 = vmatprep.subr.mxu0 0.0
    %196 = vmatpush1.msra.mxu0 0.0
    %197 = vmatprep.subr.mxu0 0.0
    %198 = vmatpush1.msra.mxu0 0.0
    %199 = vmatprep.subr.mxu0 0.0
    %200 = vmatpush1.msra.mxu0 0.0
    %201 = vmatprep.subr.mxu0 0.0
    %202 = vmatpush1.msra.mxu0 0.0
    %203 = vmatprep.subr.mxu0 0.0
    %204 = vmatpush1.msra.mxu0 0.0
    %205 = vmatprep.subr.mxu0 0.0
    %206 = vmatpush1.msra.mxu0 0.0
    %207 = vmatprep.subr.mxu0 0.0
    %208 = vmatpush1.msra.mxu0 0.0
    %209 = vmatprep.subr.mxu0 0.0
    %210 = vmatpush1.msra.mxu0 0.0
    %211 = vmatprep.subr.mxu0 0.0
    %212 = vmatpush1.msra.mxu0 0.0
    %213 = vmatprep.subr.mxu0 0.0
    %214 = vmatpush1.msra.mxu0 0.0
    %215 = vmatprep.mubr.f32.mxu0 0.0
    %216 = vmatmul.mubr.f32.gmra.mrb[0].mxu0 %v129
    %v217 = vpop.f32.mrb[0].mxu0
    %v218 = vadd.f32 %v150, %v217
    %v219 = vpop.f32.mrb[0].mxu0
    %220 = vdwg.mxu0
    %v221 = vmax.f32 %v218, 0.0
    %s222 = scalar_lea.vmem [#allocation5], 128
    %v223 = vld [vmem:[%s222] sm:$0xff]
    %v224 = vld [vmem:[%s222 + $0x8] sm:$0xff]
    %v225 = vld [vmem:[%s222 + $0x10] sm:$0xff]
    %v226 = vld [vmem:[%s222 + $0x18] sm:$0xff]
    %v227 = vld [vmem:[%s222 + $0x20] sm:$0xff]
    %v228 = vld [vmem:[%s222 + $0x28] sm:$0xff]
    %v229 = vld [vmem:[%s222 + $0x30] sm:$0xff]
    %v230 = vld [vmem:[%s222 + $0x38] sm:$0xff]
    %v231 = vld [vmem:[%s222 + $0x40] sm:$0xff]
    %v232 = vld [vmem:[%s222 + $0x48] sm:$0xff]
    %v233 = vld [vmem:[%s222 + $0x50] sm:$0xff]
    %v234 = vld [vmem:[%s222 + $0x58] sm:$0xff]
    %v235 = vld [vmem:[%s222 + $0x60] sm:$0xff]
    %v236 = vld [vmem:[%s222 + $0x68] sm:$0xff]
    %v237 = vld [vmem:[%s222 + $0x70] sm:$0xff]
    %v238 = vld [vmem:[%s222 + $0x78] sm:$0xff]
    %v239 = vld [vmem:[%s4 + $0x2] sm:$0x1]
    %v240 = vlaneseq
    %v241 = vshrl.u32 %v240, 7
    %v242 = vsub.s32 0, %v241
    %v243 = vrot.slane %v239, %v242
    %244 = vmatprep.subr.mxu0 0.0
    %245 = vmatpush1.msra.mxu0 %v223
    %246 = vmatprep.subr.mxu0 0.0
    %247 = vmatpush1.msra.mxu0 %v224
    %248 = vmatprep.subr.mxu0 0.0
    %249 = vmatpush1.msra.mxu0 %v225
    %250 = vmatprep.subr.mxu0 0.0
    %251 = vmatpush1.msra.mxu0 %v226
    %252 = vmatprep.subr.mxu0 0.0
    %253 = vmatpush1.msra.mxu0 %v227
    %254 = vmatprep.subr.mxu0 0.0
    %255 = vmatpush1.msra.mxu0 %v228
    %256 = vmatprep.subr.mxu0 0.0
    %257 = vmatpush1.msra.mxu0 %v229
    %258 = vmatprep.subr.mxu0 0.0
    %259 = vmatpush1.msra.mxu0 %v230
    %260 = vmatprep.subr.mxu0 0.0
    %261 = vmatpush1.msra.mxu0 %v231
    %262 = vmatprep.subr.mxu0 0.0
    %263 = vmatpush1.msra.mxu0 %v232
    %264 = vmatprep.subr.mxu0 0.0
    %265 = vmatpush1.msra.mxu0 %v233
    %266 = vmatprep.subr.mxu0 0.0
    %267 = vmatpush1.msra.mxu0 %v234
    %268 = vmatprep.subr.mxu0 0.0
    %269 = vmatpush1.msra.mxu0 %v235
    %270 = vmatprep.subr.mxu0 0.0
    %271 = vmatpush1.msra.mxu0 %v236
    %272 = vmatprep.subr.mxu0 0.0
    %273 = vmatpush1.msra.mxu0 %v237
    %274 = vmatprep.subr.mxu0 0.0
    %275 = vmatpush1.msra.mxu0 %v238
    %276 = vmatprep.subr.mxu0 0.0
    %277 = vmatpush1.msra.mxu0 0.0
    %278 = vmatprep.subr.mxu0 0.0
    %279 = vmatpush1.msra.mxu0 0.0
    %280 = vmatprep.subr.mxu0 0.0
    %281 = vmatpush1.msra.mxu0 0.0
    %282 = vmatprep.subr.mxu0 0.0
    %283 = vmatpush1.msra.mxu0 0.0
    %284 = vmatprep.subr.mxu0 0.0
    %285 = vmatpush1.msra.mxu0 0.0
    %286 = vmatprep.subr.mxu0 0.0
    %287 = vmatpush1.msra.mxu0 0.0
    %288 = vmatprep.subr.mxu0 0.0
    %289 = vmatpush1.msra.mxu0 0.0
    %290 = vmatprep.subr.mxu0 0.0
    %291 = vmatpush1.msra.mxu0 0.0
    %292 = vmatprep.subr.mxu0 0.0
    %293 = vmatpush1.msra.mxu0 0.0
    %294 = vmatprep.subr.mxu0 0.0
    %295 = vmatpush1.msra.mxu0 0.0
    %296 = vmatprep.subr.mxu0 0.0
    %297 = vmatpush1.msra.mxu0 0.0
    %298 = vmatprep.subr.mxu0 0.0
    %299 = vmatpush1.msra.mxu0 0.0
    %300 = vmatprep.subr.mxu0 0.0
    %301 = vmatpush1.msra.mxu0 0.0
    %302 = vmatprep.subr.mxu0 0.0
    %303 = vmatpush1.msra.mxu0 0.0
    %304 = vmatprep.subr.mxu0 0.0
    %305 = vmatpush1.msra.mxu0 0.0
    %306 = vmatprep.subr.mxu0 0.0
    %307 = vmatpush1.msra.mxu0 0.0
    %308 = vmatprep.mubr.f32.mxu0 0.0
    %309 = vmatmul.mubr.f32.gmra.mrb[0].mxu0 %v221
    %v310 = vpop.f32.mrb[0].mxu0
    %v311 = vadd.f32 %v243, %v310
    %v312 = vpop.f32.mrb[0].mxu0
    %313 = vdwg.mxu0
    %v314 = vmax.f32 %v311, 0.0
    %s315 = scalar_lea.vmem [#allocation5], 256
    %v316 = vld [vmem:[%s315] sm:$0xff]
    %v317 = vld [vmem:[%s315 + $0x8] sm:$0xff]
    %v318 = vld [vmem:[%s315 + $0x10] sm:$0xff]
    %v319 = vld [vmem:[%s315 + $0x18] sm:$0xff]
    %v320 = vld [vmem:[%s315 + $0x20] sm:$0xff]
    %v321 = vld [vmem:[%s315 + $0x28] sm:$0xff]
    %v322 = vld [vmem:[%s315 + $0x30] sm:$0xff]
    %v323 = vld [vmem:[%s315 + $0x38] sm:$0xff]
    %v324 = vld [vmem:[%s315 + $0x40] sm:$0xff]
    %v325 = vld [vmem:[%s315 + $0x48] sm:$0xff]
    %v326 = vld [vmem:[%s315 + $0x50] sm:$0xff]
    %v327 = vld [vmem:[%s315 + $0x58] sm:$0xff]
    %v328 = vld [vmem:[%s315 + $0x60] sm:$0xff]
    %v329 = vld [vmem:[%s315 + $0x68] sm:$0xff]
    %v330 = vld [vmem:[%s315 + $0x70] sm:$0xff]
    %v331 = vld [vmem:[%s315 + $0x78] sm:$0xff]
    %v332 = vld [vmem:[%s4 + $0x3] sm:$0x1]
    %v333 = vlaneseq
    %v334 = vshrl.u32 %v333, 7
    %v335 = vsub.s32 0, %v334
    %v336 = vrot.slane %v332, %v335
    %337 = vmatprep.subr.mxu0 0.0
    %338 = vmatpush1.msra.mxu0 %v316
    %339 = vmatprep.subr.mxu0 0.0
    %340 = vmatpush1.msra.mxu0 %v317
    %341 = vmatprep.subr.mxu0 0.0
    %342 = vmatpush1.msra.mxu0 %v318
    %343 = vmatprep.subr.mxu0 0.0
    %344 = vmatpush1.msra.mxu0 %v319
    %345 = vmatprep.subr.mxu0 0.0
    %346 = vmatpush1.msra.mxu0 %v320
    %347 = vmatprep.subr.mxu0 0.0
    %348 = vmatpush1.msra.mxu0 %v321
    %349 = vmatprep.subr.mxu0 0.0
    %350 = vmatpush1.msra.mxu0 %v322
    %351 = vmatprep.subr.mxu0 0.0
    %352 = vmatpush1.msra.mxu0 %v323
    %353 = vmatprep.subr.mxu0 0.0
    %354 = vmatpush1.msra.mxu0 %v324
    %355 = vmatprep.subr.mxu0 0.0
    %356 = vmatpush1.msra.mxu0 %v325
    %357 = vmatprep.subr.mxu0 0.0
    %358 = vmatpush1.msra.mxu0 %v326
    %359 = vmatprep.subr.mxu0 0.0
    %360 = vmatpush1.msra.mxu0 %v327
    %361 = vmatprep.subr.mxu0 0.0
    %362 = vmatpush1.msra.mxu0 %v328
    %363 = vmatprep.subr.mxu0 0.0
    %364 = vmatpush1.msra.mxu0 %v329
    %365 = vmatprep.subr.mxu0 0.0
    %366 = vmatpush1.msra.mxu0 %v330
    %367 = vmatprep.subr.mxu0 0.0
    %368 = vmatpush1.msra.mxu0 %v331
    %369 = vmatprep.subr.mxu0 0.0
    %370 = vmatpush1.msra.mxu0 0.0
    %371 = vmatprep.subr.mxu0 0.0
    %372 = vmatpush1.msra.mxu0 0.0
    %373 = vmatprep.subr.mxu0 0.0
    %374 = vmatpush1.msra.mxu0 0.0
    %375 = vmatprep.subr.mxu0 0.0
    %376 = vmatpush1.msra.mxu0 0.0
    %377 = vmatprep.subr.mxu0 0.0
    %378 = vmatpush1.msra.mxu0 0.0
    %379 = vmatprep.subr.mxu0 0.0
    %380 = vmatpush1.msra.mxu0 0.0
    %381 = vmatprep.subr.mxu0 0.0
    %382 = vmatpush1.msra.mxu0 0.0
    %383 = vmatprep.subr.mxu0 0.0
    %384 = vmatpush1.msra.mxu0 0.0
    %385 = vmatprep.subr.mxu0 0.0
    %386 = vmatpush1.msra.mxu0 0.0
    %387 = vmatprep.subr.mxu0 0.0
    %388 = vmatpush1.msra.mxu0 0.0
    %389 = vmatprep.subr.mxu0 0.0
    %390 = vmatpush1.msra.mxu0 0.0
    %391 = vmatprep.subr.mxu0 0.0
    %392 = vmatpush1.msra.mxu0 0.0
    %393 = vmatprep.subr.mxu0 0.0
    %394 = vmatpush1.msra.mxu0 0.0
    %395 = vmatprep.subr.mxu0 0.0
    %396 = vmatpush1.msra.mxu0 0.0
    %397 = vmatprep.subr.mxu0 0.0
    %398 = vmatpush1.msra.mxu0 0.0
    %399 = vmatprep.subr.mxu0 0.0
    %400 = vmatpush1.msra.mxu0 0.0
    %401 = vmatprep.mubr.f32.mxu0 0.0
    %402 = vmatmul.mubr.f32.gmra.mrb[0].mxu0 %v314
    %v403 = vpop.f32.mrb[0].mxu0
    %v404 = vadd.f32 %v336, %v403
    %v405 = vpop.f32.mrb[0].mxu0
    %406 = vdwg.mxu0
    %407 = vmax.xlane.f32.xlu0 %v404
    %v408 = vpop.xlane.xlu0 %407
    %v409 = vsub.f32 %v404, %v408
    %v410 = vmul.f32 %v409, 1.442695
    %v411 = vpow.pop %v410
    %412 = vadd.xlane.f32.xlu0 %v411
    %v413 = vpop.xlane.xlu0 %412
    %v414 = vlog2.pop %v413
    %v415 = vmul.f32 %v414, 0.6931472
    %v416 = vsub.f32 %v409, %v415
    %v417 = vlaneseq
    %v418 = vand.u32 %v417, 127
    %v419 = vld [vmem:[%s1] sm:$0xff]
    %420 = vset.pattern.permute.xlu0 0
    %421 = vperm.xlu0 %420, %v419
    %v422 = vpop.permute.xlu0 %421
    %vm423 = vcmp.eq.s32.totalorder %v418, %v422
    %v424 = vsel %vm423, 1, 0
    %v425 = vcvt.s32.f32 %v424
    %v426 = vmul.f32 %v425, %v416
    %427 = vadd.xlane.f32.xlu0 %v426
    %v428 = vpop.xlane.xlu0 %427
    %v429 = vmul.f32 %v411, %v409
    %430 = vadd.xlane.f32.xlu0 %v429
    %v431 = vpop.xlane.xlu0 %430
    %v432 = vrcp.pop %v413
    %v433 = vmul.f32 %v431, %v432
    %v434 = vsub.f32 %v415, %v433
    %vm435 = vcmp.eq.s32.totalorder %v418, 0
    %v436 = vsel %vm435, %v428, 0.0
    %vm437 = vcmp.eq.s32.totalorder %v418, 1
    %439 = vset.pattern.permute.xlu0 32
    %440 = vperm.xlu0 %439, %v311
    %v441 = vpop.permute.xlu0 %440
    %v443 = vsel %vm437, %v441, 0.0
    %v444 = vadd.f32 %v436, %v443
    %vm445 = vcmp.eq.s32.totalorder %v418, 2
    %v446 = vsel %vm445, %v434, 0.0
    %v447 = vadd.f32 %v444, %v446
    %vm448 = vcmask 64512
    %449 = vst.msk [vmem:[#allocation7] sm:$0xff] %vm448, %v447
    // Predicated region
    $region30: #{tpu_custom_call.1} parent=1 // pred_check
      _
    $region31: #{tpu_custom_call.1} parent=1 // pred_check_branch
      %451 = sbr.rel (0) target = $region33
    $region32: #{tpu_custom_call.1} parent=1 // pred_region
      %s453 = ssub.s32 128, 128
      %454 = vsyncadd [#allocation4], %s453
      %s456 = sshll.u32 [#allocation7], 4
      %s457 = int_to_ptr.vmem [resolvable:$true] %s456
      %459 = dma.vmem_to_hbm [thread:$0]  %s457, 128, %s5, [#allocation4]
    $region33: #{tpu_custom_call.1} parent=1 // pred_fallthru
      _
    // Predicated region
    $region34: #{tpu_custom_call.1} parent=1 // pred_check
      _
    $region35: #{tpu_custom_call.1} parent=1 // pred_check_branch
      %461 = sbr.rel (0) target = $region37
    $region36: #{tpu_custom_call.1} parent=1 // pred_region
      %462 = dma.done [#allocation4], 128
    $region37: #{tpu_custom_call.1} parent=1 // pred_fallthru
      _
    %463 = vsyncpa [#allocation3], 1
    %464 = vsyncpa [#allocation6], 1
    %465 = vsyncpa [#allocation4], 1

</llo_original>
